<compile_context>
chip_gen: v6e
topology: v6e:2x2x1
jax: 0.10.0
libtpu: 0.0.40
codegen_flags: <defaults>
</compile_context>

<pallas_src>
import math

import jax
import jax.numpy as jnp
from jax.experimental import pallas as pl
from jax.experimental.pallas import tpu as pltpu

ALPHA = 0.5
GAMMA = 2.0          # assumed == 2 (explicit squares below)
EPSILON = 1e-9
_INV_LN2 = 1.0 / math.log(2.0)


def _cdiv(a: int, b: int) -> int:
    return -(-a // b)


def _round_up(x: int, m: int) -> int:
    return _cdiv(x, m) * m


def _round_down(x: int, m: int) -> int:
    return (x // m) * m


def _cfocal_kernel(pred_ref, tgt_ref, out_ref):
    """Per-sample (unscaled) focal sums for one (tn, C) tile of logits."""
    x = pred_ref[...]                               # (tn, C) float32 logits
    tgt = tgt_ref[...]                              # (tn, 1) int32 class ids

    # Numerically stable softmax pieces (class axis on lanes).
    m = jnp.max(x, axis=1, keepdims=True)           # (tn, 1)
    ex = jnp.exp(x - m)                             # (tn, C)
    s = jnp.sum(ex, axis=1, keepdims=True)          # (tn, 1)
    inv_s = 1.0 / s
    p = ex * inv_s + EPSILON                        # softmax + epsilon

    # Non-target branch for every class: p^2 * log2(1 - p)   (gamma == 2).
    # The clamp guards the log when softmax saturates to 1 (reference NaNs).
    nontgt = (p * p) * (jnp.log(jnp.maximum(1.0 - p, EPSILON)) * _INV_LN2)
    total = jnp.sum(nontgt, axis=1, keepdims=True)  # (tn, 1)

    # Target-class correction: a single masked reduction of the raw logits,
    # then per-row recomputation of the target probability / terms (no full
    # log-softmax tile, no masked (tn, C) term tiles).
    cls = jax.lax.broadcasted_iota(jnp.int32, x.shape, 1)
    is_t = cls == tgt
    x_t = jnp.sum(jnp.where(is_t, x, 0.0), axis=1, keepdims=True)   # target logit
    p_t = jnp.exp(x_t - m) * inv_s + EPSILON                        # == p[target]
    log2_p_t = jnp.log(p_t) * _INV_LN2                              # log2(softmax+eps)
    nontgt_t = (p_t * p_t) * (jnp.log(jnp.maximum(1.0 - p_t, EPSILON)) * _INV_LN2)

    # sum_c of: tar*(1-p)^2*log2(p) + (1-tar)*p^2*log2(1-p)
    out_ref[...] = total - nontgt_t + (1.0 - p_t) * (1.0 - p_t) * log2_p_t


def _vmem_budget_bytes() -> int:
    try:
        cap = int(pltpu.get_tpu_info().vmem_capacity_bytes)
    except Exception:
        cap = 64 * 2 ** 20
    # Leave headroom; 48 MiB is safe on v7x (64 MiB / TensorCore) and ample
    # for this kernel's buffers on v5e/v6e.
    return max(24 * 2 ** 20, min(cap - 16 * 2 ** 20, 48 * 2 ** 20))


def _pick_tile(n: int, c: int, vmem_budget: int) -> int:
    """Rows per grid step: large enough to amortize the ~0.35us per-step cost,
    small enough that double-buffered inputs + live temporaries fit VMEM."""
    c_pad = _round_up(c, 128)                 # lane-padded row width inside VMEM
    # 2 pipelined pred buffers + ~8 live (tn, C) f32 temporaries
    # + double-buffered (lane-padded) target/output columns.
    per_row_vmem = 10 * c_pad * 4 + 4 * 128 * 4
    tn_vmem = max(8, _round_down(vmem_budget // per_row_vmem, 8))
    # HBM-side target: ~4 MiB of logits per grid step.
    tn_hbm = max(8, _round_down((4 << 20) // (c * 4), 8))
    tn_cap = min(tn_vmem, tn_hbm)

    tiles = _cdiv(n, tn_cap)
    if tiles == 1 and n >= 1024:
        tiles = 2                             # keep both TensorCores busy (megacore)
    if tiles > 1 and tiles % 2:
        tiles += 1                            # even tile count -> balanced cores
    return min(tn_cap, _round_up(_cdiv(n, tiles), 8))


def cfocal_loss(pred, target):
    """pred: (N, C) float32 logits; target: (N,) integer class ids -> scalar f32."""
    n, c = pred.shape
    pred = pred.astype(jnp.float32)
    tgt = target.astype(jnp.int32).reshape(n, 1)

    vmem_budget = _vmem_budget_bytes()
    tn = _pick_tile(n, c, vmem_budget)
    num_tiles = _cdiv(n, tn)

    per_sample = pl.pallas_call(
        _cfocal_kernel,
        out_shape=jax.ShapeDtypeStruct((n, 1), jnp.float32),
        grid_spec=pltpu.PrefetchScalarGridSpec(
            num_scalar_prefetch=0,
            grid=(num_tiles,),
            in_specs=[pl.BlockSpec((tn, c), lambda i: (i, 0)),
                      pl.BlockSpec((tn, 1), lambda i: (i, 0))],
            out_specs=pl.BlockSpec((tn, 1), lambda i: (i, 0)),
        ),
        compiler_params=pltpu.CompilerParams(
            dimension_semantics=("parallel",),
            vmem_limit_bytes=int(vmem_budget),
        ),
    )(pred, tgt)

    # Fold alpha, 1/C, 1/N and the minus sign into one scalar scale.
    return (-ALPHA / c) * jnp.mean(per_sample)


def _reference(pred, target):
    """Plain-JAX transcription of the PyTorch forward (for verification)."""
    p = jax.nn.softmax(pred.astype(jnp.float32), axis=1) + EPSILON
    tar = jax.nn.one_hot(target, pred.shape[1], dtype=jnp.float32)
    ln2 = math.log(2.0)
    term = (tar * ALPHA * (1.0 - p) ** 2 * (jnp.log(p) / ln2)
            + (1.0 - tar) * ALPHA * (p ** 2) * (jnp.log(1.0 - p) / ln2))
    return jnp.mean(-jnp.mean(term, axis=1))


if __name__ == "__main__":
    key = jax.random.PRNGKey(0)
    ks = jax.random.split(key, 6)

    # Case 1: small class count (C < 128), single tile.
    N, C = 8, 16
    pred = jax.random.normal(ks[0], (N, C), dtype=jnp.float32)
    target = jax.random.randint(ks[1], (N,), 0, C, dtype=jnp.int32)
    loss = cfocal_loss(pred, target)
    jax.block_until_ready(loss)
    ref = _reference(pred, target)
    assert loss.shape == ()
    assert bool(jnp.isfinite(loss))
    assert bool(jnp.allclose(loss, ref, rtol=5e-4, atol=5e-5)), (loss, ref)

    # Case 2: wide class count (C >= 128).
    N2, C2 = 16, 256
    pred2 = jax.random.normal(ks[2], (N2, C2), dtype=jnp.float32)
    target2 = jax.random.randint(ks[3], (N2,), 0, C2, dtype=jnp.int32)
    loss2 = cfocal_loss(pred2, target2)
    jax.block_until_ready(loss2)
    ref2 = _reference(pred2, target2)
    assert bool(jnp.isfinite(loss2))
    assert bool(jnp.allclose(loss2, ref2, rtol=5e-4, atol=5e-5)), (loss2, ref2)

    # Case 3: multi-tile grid with a ragged tail (exercises OOB-masked blocks
    # and the two-TensorCore split), shapes not multiples of 8 / 128.
    N3, C3 = 3001, 40
    pred3 = jax.random.normal(ks[4], (N3, C3), dtype=jnp.float32)
    target3 = jax.random.randint(ks[5], (N3,), 0, C3, dtype=jnp.int32)
    loss3 = cfocal_loss(pred3, target3)
    jax.block_until_ready(loss3)
    ref3 = _reference(pred3, target3)
    assert bool(jnp.isfinite(loss3))
    assert bool(jnp.allclose(loss3, ref3, rtol=5e-4, atol=5e-5)), (loss3, ref3)

    print("KERNEL_OK")
</pallas_src>

<mosaic_0001>
module attributes {stable_mosaic.version = 11 : i64} {
  func.func @_cfocal_kernel(%arg0: i32, %arg1: memref<8x16xf32, #tpu.memory_space<vmem>>, %arg2: memref<8x1xi32, #tpu.memory_space<vmem>>, %arg3: memref<8x1xf32, #tpu.memory_space<vmem>>) attributes {dimension_semantics = [#tpu.dimension_semantics<parallel>], iteration_bounds = array<i64: 1>, scalar_prefetch = 0 : i64, scratch_operands = 0 : i64, tpu.core_type = #tpu.core_type<tc>, window_params = [{transform_indices = @transform_0, window_bounds = array<i64: 8, 16>}, {transform_indices = @transform_1, window_bounds = array<i64: 8, 1>}, {transform_indices = @transform_2, window_bounds = array<i64: 8, 1>}]} {
    %c0 = arith.constant 0 : index
    %c0_0 = arith.constant 0 : index
    %0 = vector.load %arg1[%c0, %c0_0] : memref<8x16xf32, #tpu.memory_space<vmem>>, vector<8x16xf32>
    %c0_1 = arith.constant 0 : index
    %c0_2 = arith.constant 0 : index
    %1 = vector.load %arg2[%c0_1, %c0_2] : memref<8x1xi32, #tpu.memory_space<vmem>>, vector<8x1xi32>
    %cst = arith.constant dense<0xFF800000> : vector<8xf32>
    %2 = vector.multi_reduction <maximumf>, %0, %cst [1] : vector<8x16xf32> to vector<8xf32>
    %3 = vector.shape_cast %2 : vector<8xf32> to vector<8x1xf32>
    %4 = vector.broadcast %3 : vector<8x1xf32> to vector<8x16xf32>
    %5 = arith.subf %0, %4 : vector<8x16xf32>
    %6 = math.exp %5 : vector<8x16xf32>
    %cst_3 = arith.constant dense<0.000000e+00> : vector<8xf32>
    %7 = vector.multi_reduction <add>, %6, %cst_3 [1] : vector<8x16xf32> to vector<8xf32>
    %8 = vector.shape_cast %7 : vector<8xf32> to vector<8x1xf32>
    %cst_4 = arith.constant 1.000000e+00 : f32
    %9 = vector.broadcast %cst_4 : f32 to vector<8x1xf32>
    %10 = arith.divf %9, %8 : vector<8x1xf32>
    %11 = vector.broadcast %10 : vector<8x1xf32> to vector<8x16xf32>
    %12 = arith.mulf %6, %11 : vector<8x16xf32>
    %cst_5 = arith.constant 9.99999971E-10 : f32
    %13 = vector.broadcast %cst_5 : f32 to vector<8x16xf32>
    %14 = arith.addf %12, %13 : vector<8x16xf32>
    %15 = arith.mulf %14, %14 : vector<8x16xf32>
    %cst_6 = arith.constant 1.000000e+00 : f32
    %16 = vector.broadcast %cst_6 : f32 to vector<8x16xf32>
    %17 = arith.subf %16, %14 : vector<8x16xf32>
    %cst_7 = arith.constant 9.99999971E-10 : f32
    %18 = vector.broadcast %cst_7 : f32 to vector<8x16xf32>
    %19 = arith.maximumf %17, %18 : vector<8x16xf32>
    %20 = math.log %19 : vector<8x16xf32>
    %cst_8 = arith.constant 1.44269502 : f32
    %21 = vector.broadcast %cst_8 : f32 to vector<8x16xf32>
    %22 = arith.mulf %20, %21 : vector<8x16xf32>
    %23 = arith.mulf %15, %22 : vector<8x16xf32>
    %cst_9 = arith.constant dense<0.000000e+00> : vector<8xf32>
    %24 = vector.multi_reduction <add>, %23, %cst_9 [1] : vector<8x16xf32> to vector<8xf32>
    %25 = vector.shape_cast %24 : vector<8xf32> to vector<8x1xf32>
    %26 = tpu.iota {dimensions = array<i32: 1>} : vector<8x16xi32>
    %27 = vector.broadcast %1 : vector<8x1xi32> to vector<8x16xi32>
    %28 = arith.cmpi eq, %26, %27 : vector<8x16xi32>
    %cst_10 = arith.constant 0.000000e+00 : f32
    %29 = vector.broadcast %cst_10 : f32 to vector<8x16xf32>
    %30 = arith.select %28, %0, %29 : vector<8x16xi1>, vector<8x16xf32>
    %cst_11 = arith.constant dense<0.000000e+00> : vector<8xf32>
    %31 = vector.multi_reduction <add>, %30, %cst_11 [1] : vector<8x16xf32> to vector<8xf32>
    %32 = vector.shape_cast %31 : vector<8xf32> to vector<8x1xf32>
    %33 = arith.subf %32, %3 : vector<8x1xf32>
    %34 = math.exp %33 : vector<8x1xf32>
    %35 = arith.mulf %34, %10 : vector<8x1xf32>
    %cst_12 = arith.constant 9.99999971E-10 : f32
    %36 = vector.broadcast %cst_12 : f32 to vector<8x1xf32>
    %37 = arith.addf %35, %36 : vector<8x1xf32>
    %38 = math.log %37 : vector<8x1xf32>
    %cst_13 = arith.constant 1.44269502 : f32
    %39 = vector.broadcast %cst_13 : f32 to vector<8x1xf32>
    %40 = arith.mulf %38, %39 : vector<8x1xf32>
    %41 = arith.mulf %37, %37 : vector<8x1xf32>
    %cst_14 = arith.constant 1.000000e+00 : f32
    %42 = vector.broadcast %cst_14 : f32 to vector<8x1xf32>
    %43 = arith.subf %42, %37 : vector<8x1xf32>
    %cst_15 = arith.constant 9.99999971E-10 : f32
    %44 = vector.broadcast %cst_15 : f32 to vector<8x1xf32>
    %45 = arith.maximumf %43, %44 : vector<8x1xf32>
    %46 = math.log %45 : vector<8x1xf32>
    %cst_16 = arith.constant 1.44269502 : f32
    %47 = vector.broadcast %cst_16 : f32 to vector<8x1xf32>
    %48 = arith.mulf %46, %47 : vector<8x1xf32>
    %49 = arith.mulf %41, %48 : vector<8x1xf32>
    %50 = arith.subf %25, %49 : vector<8x1xf32>
    %cst_17 = arith.constant 1.000000e+00 : f32
    %51 = vector.broadcast %cst_17 : f32 to vector<8x1xf32>
    %52 = arith.subf %51, %37 : vector<8x1xf32>
    %cst_18 = arith.constant 1.000000e+00 : f32
    %53 = vector.broadcast %cst_18 : f32 to vector<8x1xf32>
    %54 = arith.subf %53, %37 : vector<8x1xf32>
    %55 = arith.mulf %52, %54 : vector<8x1xf32>
    %56 = arith.mulf %55, %40 : vector<8x1xf32>
    %57 = arith.addf %50, %56 : vector<8x1xf32>
    %c0_19 = arith.constant 0 : index
    %c0_20 = arith.constant 0 : index
    %58 = vector.load %arg3[%c0_19, %c0_20] : memref<8x1xf32, #tpu.memory_space<vmem>>, vector<8x1xf32>
    tpu.vector_store %arg3[%c0_19, %c0_20], %57 {strides = array<i32>} : memref<8x1xf32, #tpu.memory_space<vmem>>, vector<8x1xf32>,
    return
  }
  func.func @transform_0(%arg0: i32) -> (i32, i32) {
    %c0_i32 = arith.constant 0 : i32
    %c0_i32_0 = arith.constant 0 : i32
    return %arg0, %c0_i32 : i32, i32
  }
  func.func @transform_1(%arg0: i32) -> (i32, i32) {
    %c0_i32 = arith.constant 0 : i32
    %c0_i32_0 = arith.constant 0 : i32
    return %arg0, %c0_i32 : i32, i32
  }
  func.func @transform_2(%arg0: i32) -> (i32, i32) {
    %c0_i32 = arith.constant 0 : i32
    %c0_i32_0 = arith.constant 0 : i32
    return %arg0, %c0_i32 : i32, i32
  }
}

</mosaic_0001>

<llo_original>
// kernel: tpu_custom_call.1
$region0: #{tpu_custom_call.1}
  #allocation0 [shape = 'u32[]', space=smem, size = 0x4, offset = 0x4, fixed_abs, tag = 'smem constant byte address 0x4 - core index']
  #allocation1 [shape = 'u32[144,128]{1,0:T(1,128)}', space=vmem, size = 0x12000, scoped, tag = 'internal scratch']
  %s0 = inlined_call_operand.vmem [shape: f32[8,16], index: 0, kind: input, shape index: {}]
  %s1 = inlined_call_operand.vmem [shape: s32[8,1], index: 1, kind: input, shape index: {}]
  %s2 = inlined_call_operand.vmem [shape: f32[8,1], index: 2, kind: output, shape index: {}]
  %s3 = sld [smem:[#allocation0]]
  $region18: #{tpu_custom_call.1} parent=0
    _
  %s5 = ssub.s32 1, %s3
  %s6 = scalar_select 0, %s5, %s3
  // Predicated region
  $region2: #{tpu_custom_call.1} parent=0 // pred_check
    _
  $region3: #{tpu_custom_call.1} parent=0 // pred_check_branch
    %8 = sbr.rel (0) target = $region5
  $region4: #{tpu_custom_call.1} parent=0 // pred_region
    _
  $region5: #{tpu_custom_call.1} parent=0 // pred_fallthru
    _
  // Predicated region
  $region6: #{tpu_custom_call.1} parent=0 // pred_check
    _
  $region7: #{tpu_custom_call.1} parent=0 // pred_check_branch
    %10 = sbr.rel (0) target = $region9
  $region8: #{tpu_custom_call.1} parent=0 // pred_region
    _
  $region9: #{tpu_custom_call.1} parent=0 // pred_fallthru
    _
  %v11 = vld [vmem:[%s0] sm:$0xff]
  %v12 = vld [vmem:[%s1] sm:$0xff]
  %vm13 = vcmask 130048
  %v14 = vsel %vm13, %v11, -inf
  %15 = vmax.xlane.f32.xlu0 %v14
  %v16 = vpop.xlane.xlu0 %15
  %v17 = vsub.f32 %v11, %v16
  %v18 = vmul.f32 %v17, 1.442695
  %v19 = vpow.pop %v18
  %v20 = vsel %vm13, %v19, 0.0
  %21 = vadd.xlane.f32.xlu0 %v20
  %v22 = vpop.xlane.xlu0 %21
  %v23 = vrcp.pop %v22
  %v24 = vmul.f32 1.0, %v23
  %v25 = vmul.f32 %v19, %v24
  %v26 = vadd.f32 %v25, 1e-09
  %v27 = vmul.f32 %v26, %v26
  %v28 = vsub.f32 1.0, %v26
  %v29 = vmax.f32 %v28, 1e-09
  %v30 = vlog2.pop %v29
  %v31 = vmul.f32 %v30, 0.6931472
  %v32 = vmul.f32 %v31, 1.442695
  %v33 = vmul.f32 %v27, %v32
  %v34 = vsel %vm13, %v33, 0.0
  %35 = vadd.xlane.f32.xlu0 %v34
  %v36 = vpop.xlane.xlu0 %35
  %v37 = vlaneseq
  %v38 = vand.u32 %v37, 127
  %39 = vset.pattern.permute.xlu0 0
  %40 = vperm.xlu0 %39, %v12
  %v41 = vpop.permute.xlu0 %40
  %vm42 = vcmp.eq.s32.totalorder %v38, %v41
  %v43 = vsel %vm42, %v11, 0.0
  %v44 = vsel %vm13, %v43, 0.0
  %45 = vadd.xlane.f32.xlu0 %v44
  %v46 = vpop.xlane.xlu0 %45
  %v47 = vsub.f32 %v46, %v16
  %v48 = vmul.f32 %v47, 1.442695
  %v49 = vpow.pop %v48
  %v50 = vmul.f32 %v49, %v24
  %v51 = vadd.f32 %v50, 1e-09
  %v52 = vlog2.pop %v51
  %v53 = vmul.f32 %v52, 0.6931472
  %v54 = vmul.f32 %v53, 1.442695
  %v55 = vmul.f32 %v51, %v51
  %v56 = vsub.f32 1.0, %v51
  %v57 = vmax.f32 %v56, 1e-09
  %v58 = vlog2.pop %v57
  %v59 = vmul.f32 %v58, 0.6931472
  %v60 = vmul.f32 %v59, 1.442695
  %v61 = vmul.f32 %v55, %v60
  %v62 = vsub.f32 %v36, %v61
  %v63 = vmul.f32 %v56, %v56
  %v64 = vmul.f32 %v63, %v54
  %v65 = vadd.f32 %v62, %v64
  %vm66 = vcmask 7168
  %67 = vst.msk [vmem:[%s2] sm:$0xff] %vm66, %v65
  // Predicated region
  $region10: #{tpu_custom_call.1} parent=0 // pred_check
    _
  $region11: #{tpu_custom_call.1} parent=0 // pred_check_branch
    %69 = sbr.rel (0) target = $region13
  $region12: #{tpu_custom_call.1} parent=0 // pred_region
    _
  $region13: #{tpu_custom_call.1} parent=0 // pred_fallthru
    _
  // Predicated region
  $region14: #{tpu_custom_call.1} parent=0 // pred_check
    _
  $region15: #{tpu_custom_call.1} parent=0 // pred_check_branch
    %71 = sbr.rel (0) target = $region17
  $region16: #{tpu_custom_call.1} parent=0 // pred_region
    _
  $region17: #{tpu_custom_call.1} parent=0 // pred_fallthru
    _

</llo_original>
